<compile_context>
chip_gen: v7x
topology: tpu7x:2x2x1
jax: 0.10.0
libtpu: 0.0.40
codegen_flags: <defaults>
</compile_context>

<pallas_src>
import functools
import math

import jax
import jax.numpy as jnp
from jax.experimental import pallas as pl
from jax.experimental.pallas import tpu as pltpu


def _layer_norm(v, w, b, eps):
    mu = jnp.mean(v, axis=-1, keepdims=True)
    var = jnp.mean((v - mu) ** 2, axis=-1, keepdims=True)
    return (v - mu) * jax.lax.rsqrt(var + eps) * w + b


# --------------------------- kernel 1: LN1 + QKV ----------------------------
def _qkv_kernel(x_ref, ln_w_ref, ln_b_ref,
                wq_ref, bq_ref, wk_ref, bk_ref, wv_ref, bv_ref,
                q_ref, k_ref, v_ref, *, eps, scale):
    x = x_ref[...].astype(jnp.float32)                       # (TS, H)
    h = _layer_norm(x, ln_w_ref[...], ln_b_ref[...], eps)    # f32 VPU math
    h = h.astype(wq_ref.dtype)                               # MXU operand dtype
    q = jnp.dot(h, wq_ref[...], preferred_element_type=jnp.float32) + bq_ref[...]
    k = jnp.dot(h, wk_ref[...], preferred_element_type=jnp.float32) + bk_ref[...]
    v = jnp.dot(h, wv_ref[...], preferred_element_type=jnp.float32) + bv_ref[...]
    q_ref[...] = (q * scale).astype(q_ref.dtype)             # fold 1/sqrt(hd) into q
    k_ref[...] = k.astype(k_ref.dtype)
    v_ref[...] = v.astype(v_ref.dtype)


# ------------------------ kernel 2: per-head attention ----------------------
def _attn_kernel(q_ref, kT_ref, v_ref, o_ref, *, valid_len, exp_dtype, approx_recip):
    q = q_ref[...]                                           # (TQ, hd), pre-scaled
    s = jnp.dot(q, kT_ref[...], preferred_element_type=jnp.float32)   # (TQ, S_pad)
    s_pad = s.shape[-1]
    if valid_len < s_pad:                                    # mask padded key columns
        col = jax.lax.broadcasted_iota(jnp.int32, s.shape, 1)
        s = jnp.where(col < valid_len, s, -1e30)
    s = s - jnp.max(s, axis=-1, keepdims=True)
    p = jnp.exp(s.astype(exp_dtype))                         # bf16 exp on v6e/v7x
    denom = jnp.sum(p.astype(jnp.float32), axis=-1, keepdims=True)
    o = jnp.dot(p.astype(v_ref.dtype), v_ref[...],
                preferred_element_type=jnp.float32)          # (TQ, hd)
    if approx_recip:
        o = o * pl.reciprocal(denom, approx=True)            # normalize AFTER P.V
    else:
        o = o / denom                                        # exact path for validation
    o_ref[...] = o.astype(o_ref.dtype)


# ---- kernel 3: out-proj + residual + LN2 + MLP (chunked over inner dim) ----
def _out_mlp_kernel(x_ref, ctx_ref, wo_ref, bo_ref, ln2_w_ref, ln2_b_ref,
                    w1_ref, b1_ref, w2_ref, b2_ref, o_ref,
                    h2_ref, acc_ref, *, eps):
    c = pl.program_id(2)

    @pl.when(c == 0)
    def _():
        x = x_ref[...].astype(jnp.float32)                   # residual stream, f32
        attn = jnp.dot(ctx_ref[...], wo_ref[...],
                       preferred_element_type=jnp.float32) + bo_ref[...]
        resid = x + attn
        h2_ref[...] = _layer_norm(resid, ln2_w_ref[...], ln2_b_ref[...],
                                  eps).astype(h2_ref.dtype)
        acc_ref[...] = resid + b2_ref[...]                   # accumulator starts at residual+b2

    m = jnp.dot(h2_ref[...], w1_ref[...],
                preferred_element_type=jnp.float32) + b1_ref[...]
    m = jax.nn.gelu(m, approximate=True)                     # tanh-GELU, f32 on EUP
    acc_ref[...] += jnp.dot(m.astype(w2_ref.dtype), w2_ref[...],
                            preferred_element_type=jnp.float32)

    @pl.when(c == pl.num_programs(2) - 1)
    def _():
        o_ref[...] = acc_ref[...].astype(o_ref.dtype)


# ------------------------------- wrapper helpers ------------------------------
def _full_spec(a):
    nd = a.ndim
    return pl.BlockSpec(a.shape, lambda *_, _nd=nd: (0,) * _nd)


def _round_up(x, m):
    return -(-x // m) * m


def _pick_seq_tile(S, max_tile=512):
    """Pick a seq tile and the padded seq length (multiple of the tile)."""
    s8 = _round_up(S, 8)
    if s8 <= max_tile:
        return s8, s8
    best = None
    for t in (512, 384, 256, 128):
        if t > max_tile:
            continue
        pad = _round_up(S, t) - S
        key = (pad, -t)                  # minimize padding, prefer bigger tile
        if best is None or key < best[0]:
            best = (key, t)
    t = best[1]
    return t, _round_up(S, t)


def _pick_inner_chunk(inner, max_chunk=1024):
    """Chunk the MLP intermediate dim; chunks are 128-aligned via zero padding."""
    if inner <= max_chunk:
        return inner, inner
    ic = 512
    return ic, _round_up(inner, ic)


def _vmem_limit_bytes():
    try:
        cap = int(pltpu.get_tpu_info().vmem_capacity_bytes)
    except Exception:
        cap = 64 * 1024 * 1024           # conservative (v7x-sized) fallback
    return max(32 * 1024 * 1024, (cap * 4) // 5)   # ~0.8x physical, no 64 MiB clamp


def _softmax_exp_dtype(compute_dtype):
    if compute_dtype != jnp.bfloat16:
        return jnp.float32
    try:
        kind = jax.devices()[0].device_kind.lower()
    except Exception:
        kind = ""
    # bf16 EUP exp only on v6e / v7x; v5e and older have no bf16 EUP/VPU.
    if ("v6" in kind) or ("v7" in kind):
        return jnp.bfloat16
    return jnp.float32


# ---------------------------------- wrapper -----------------------------------
def siglip_encoder_layer(x, params, *, num_heads, eps,
                         compute_dtype=jnp.bfloat16,
                         seq_tile=None, inner_chunk=None):
    B, S, H = x.shape
    assert H % num_heads == 0
    hd = H // num_heads
    inner = params["fc1_w"].shape[0]

    if seq_tile is None:
        ts, S_pad = _pick_seq_tile(S)
    else:
        ts, S_pad = seq_tile, _round_up(S, seq_tile)
    n_st = S_pad // ts

    if inner_chunk is None:
        ic, inner_pad = _pick_inner_chunk(inner)
    else:
        ic, inner_pad = inner_chunk, _round_up(inner, inner_chunk)
    n_ic = inner_pad // ic

    vmem_limit = _vmem_limit_bytes()
    exp_dtype = _softmax_exp_dtype(compute_dtype)
    approx_recip = (compute_dtype == jnp.bfloat16)

    def t(w):    # PyTorch (out,in) -> (in,out), cast to MXU compute dtype
        return jnp.asarray(w).T.astype(compute_dtype)

    def row(b):  # 1-D param -> (1, N) f32 row (applied/added in f32)
        return jnp.asarray(b).reshape(1, -1).astype(jnp.float32)

    ln1_w, ln1_b = row(params["ln1_w"]), row(params["ln1_b"])
    ln2_w, ln2_b = row(params["ln2_w"]), row(params["ln2_b"])
    wq, bq = t(params["q_w"]), row(params["q_b"])
    wk, bk = t(params["k_w"]), row(params["k_b"])
    wv, bv = t(params["v_w"]), row(params["v_b"])
    wo, bo = t(params["o_w"]), row(params["o_b"])
    w1, b1 = t(params["fc1_w"]), row(params["fc1_b"])
    w2, b2 = t(params["fc2_w"]), row(params["fc2_b"])

    # Zero-pad the MLP intermediate dim so it tiles into lane-aligned chunks
    # (gelu(0) == 0 and padded w2 rows are zero, so this is exact).
    if inner_pad > inner:
        w1 = jnp.pad(w1, ((0, 0), (0, inner_pad - inner)))
        b1 = jnp.pad(b1, ((0, 0), (0, inner_pad - inner)))
        w2 = jnp.pad(w2, ((0, inner_pad - inner), (0, 0)))

    # Zero-pad the sequence so it tiles into aligned blocks; padded key columns
    # are masked inside the attention kernel and padded rows sliced off at the end.
    x_pad = x if S_pad == S else jnp.pad(x, ((0, 0), (0, S_pad - S), (0, 0)))

    seq_block2 = lambda: pl.BlockSpec((None, ts, H), lambda st, b: (b, st, 0))
    seq_block3 = lambda: pl.BlockSpec((None, ts, H), lambda st, b, c: (b, st, 0))

    # ---- kernel 1: LN1 + fused QKV projection, grid (seq_tiles, batch) ------
    qkv_args = (x_pad, ln1_w, ln1_b, wq, bq, wk, bk, wv, bv)
    qkv_cost = pl.CostEstimate(
        flops=2 * B * S_pad * H * 3 * H,
        transcendentals=B * S_pad,
        bytes_accessed=B * S_pad * H * 4 + 3 * (H * H + H) * 2 + 3 * B * S_pad * H * 2,
    )
    q, k, v = pl.pallas_call(
        functools.partial(_qkv_kernel, eps=eps, scale=1.0 / math.sqrt(hd)),
        out_shape=tuple(jax.ShapeDtypeStruct((B, S_pad, H), compute_dtype)
                        for _ in range(3)),
        grid_spec=pltpu.PrefetchScalarGridSpec(
            num_scalar_prefetch=0,
            grid=(n_st, B),            # seq axis leads: both TCs busy even at B == 1
            in_specs=[seq_block2()] + [_full_spec(a) for a in qkv_args[1:]],
            out_specs=tuple(seq_block2() for _ in range(3)),
        ),
        compiler_params=pltpu.CompilerParams(
            dimension_semantics=("parallel", "parallel"),
            vmem_limit_bytes=vmem_limit),
        cost_estimate=qkv_cost,
    )(*qkv_args)

    # Wrapper-side layout plumbing (reshape free; transposes handled by XLA).
    # K is pre-transposed to (B, nh, hd, S) so the kernel matmul needs no relayout.
    qh = q.reshape(B, S_pad, num_heads, hd).transpose(0, 2, 1, 3)   # (B, nh, S, hd)
    kT = k.reshape(B, S_pad, num_heads, hd).transpose(0, 2, 3, 1)   # (B, nh, hd, S)
    vh = v.reshape(B, S_pad, num_heads, hd).transpose(0, 2, 1, 3)   # (B, nh, S, hd)

    # ---- kernel 2: softmax attention, grid (head, batch, q_tile) ------------
    attn_cost = pl.CostEstimate(
        flops=4 * B * S_pad * S_pad * H,
        transcendentals=B * num_heads * S_pad * S_pad,
        bytes_accessed=4 * B * S_pad * H * 2,
    )
    ctx_h = pl.pallas_call(
        functools.partial(_attn_kernel, valid_len=S, exp_dtype=exp_dtype,
                          approx_recip=approx_recip),
        out_shape=jax.ShapeDtypeStruct((B, num_heads, S_pad, hd), compute_dtype),
        grid_spec=pltpu.PrefetchScalarGridSpec(
            num_scalar_prefetch=0,
            grid=(num_heads, B, n_st),   # head axis leads (>= 2 even when B == 1)
            in_specs=[
                pl.BlockSpec((None, None, ts, hd), lambda h, b, qt: (b, h, qt, 0)),
                pl.BlockSpec((None, None, hd, S_pad), lambda h, b, qt: (b, h, 0, 0)),
                pl.BlockSpec((None, None, S_pad, hd), lambda h, b, qt: (b, h, 0, 0)),
            ],
            out_specs=pl.BlockSpec((None, None, ts, hd),
                                   lambda h, b, qt: (b, h, qt, 0)),
        ),
        compiler_params=pltpu.CompilerParams(
            dimension_semantics=("parallel", "parallel", "parallel"),
            vmem_limit_bytes=vmem_limit),
        cost_estimate=attn_cost,
    )(qh, kT, vh)

    ctx = ctx_h.transpose(0, 2, 1, 3).reshape(B, S_pad, H)

    # ---- kernel 3: out-proj + residual + LN2 + MLP (inner dim chunked) ------
    mlp_args = (x_pad, ctx, wo, bo, ln2_w, ln2_b, w1, b1, w2, b2)
    mlp_cost = pl.CostEstimate(
        flops=2 * B * S_pad * (H * H + 2 * H * inner_pad),
        transcendentals=B * S_pad * (inner_pad + 2),
        bytes_accessed=B * S_pad * H * 10 + (H * H + 2 * H * inner_pad) * 2,
    )
    out = pl.pallas_call(
        functools.partial(_out_mlp_kernel, eps=eps),
        out_shape=jax.ShapeDtypeStruct((B, S_pad, H), x.dtype),
        grid_spec=pltpu.PrefetchScalarGridSpec(
            num_scalar_prefetch=0,
            grid=(n_st, B, n_ic),        # inner-dim reduction axis last ("arbitrary")
            in_specs=[
                seq_block3(), seq_block3(),
                _full_spec(wo), _full_spec(bo),
                _full_spec(ln2_w), _full_spec(ln2_b),
                pl.BlockSpec((H, ic), lambda st, b, c: (0, c)),
                pl.BlockSpec((1, ic), lambda st, b, c: (0, c)),
                pl.BlockSpec((ic, H), lambda st, b, c: (c, 0)),
                _full_spec(b2),
            ],
            out_specs=seq_block3(),
            scratch_shapes=[pltpu.VMEM((ts, H), compute_dtype),   # h2 (post-LN2)
                            pltpu.VMEM((ts, H), jnp.float32)],    # residual+MLP accumulator
        ),
        compiler_params=pltpu.CompilerParams(
            dimension_semantics=("parallel", "parallel", "arbitrary"),
            vmem_limit_bytes=vmem_limit),
        cost_estimate=mlp_cost,
    )(*mlp_args)

    return out if S_pad == S else out[:, :S, :]


# ----------------------------- reference (pure JAX, f32) ---------------------
def reference_forward(x, p, *, num_heads, eps):
    def ln(v, w, b):
        mu = jnp.mean(v, axis=-1, keepdims=True)
        var = jnp.mean((v - mu) ** 2, axis=-1, keepdims=True)
        return (v - mu) / jnp.sqrt(var + eps) * w + b

    B, S, H = x.shape
    hd = H // num_heads

    h = ln(x, p["ln1_w"], p["ln1_b"])
    q = h @ p["q_w"].T + p["q_b"]
    k = h @ p["k_w"].T + p["k_b"]
    v = h @ p["v_w"].T + p["v_b"]

    def split(a):
        return a.reshape(B, S, num_heads, hd).transpose(0, 2, 1, 3)

    qh, kh, vh = split(q), split(k), split(v)
    s = jnp.einsum("bhqd,bhkd->bhqk", qh, kh) / jnp.sqrt(float(hd))
    pattn = jax.nn.softmax(s, axis=-1)
    o = jnp.einsum("bhqk,bhkd->bhqd", pattn, vh).transpose(0, 2, 1, 3).reshape(B, S, H)
    o = o @ p["o_w"].T + p["o_b"]
    x = x + o

    h2 = ln(x, p["ln2_w"], p["ln2_b"])
    m = jax.nn.gelu(h2 @ p["fc1_w"].T + p["fc1_b"], approximate=True)
    m = m @ p["fc2_w"].T + p["fc2_b"]
    return x + m


if __name__ == "__main__":
    eps = 1e-6

    def make_params(key, H, inner, dtype=jnp.float32):
        keys = jax.random.split(key, 16)

        def init(kk, shape, scale=0.05):
            return (jax.random.normal(kk, shape, dtype=jnp.float32) * scale).astype(dtype)

        return {
            "ln1_w": jnp.ones((H,), dtype) + init(keys[0], (H,)),
            "ln1_b": init(keys[1], (H,)),
            "q_w": init(keys[2], (H, H)), "q_b": init(keys[3], (H,)),
            "k_w": init(keys[4], (H, H)), "k_b": init(keys[5], (H,)),
            "v_w": init(keys[6], (H, H)), "v_b": init(keys[7], (H,)),
            "o_w": init(keys[8], (H, H)), "o_b": init(keys[9], (H,)),
            "ln2_w": jnp.ones((H,), dtype) + init(keys[10], (H,)),
            "ln2_b": init(keys[11], (H,)),
            "fc1_w": init(keys[12], (inner, H)), "fc1_b": init(keys[13], (inner,)),
            "fc2_w": init(keys[14], (H, inner)), "fc2_b": init(keys[15], (H,)),
        }

    root = jax.random.PRNGKey(0)
    k_p1, k_x1, k_p2, k_x2 = jax.random.split(root, 4)

    # ---- case 1: small aligned shapes (B=2, S=8, H=32, heads=4, inner=64) ----
    B, S, H, num_heads, inner = 2, 8, 32, 4, 64
    params = make_params(k_p1, H, inner)
    x = jax.random.normal(k_x1, (B, S, H), dtype=jnp.float32)
    ref = reference_forward(x, params, num_heads=num_heads, eps=eps)

    out32 = jax.block_until_ready(
        siglip_encoder_layer(x, params, num_heads=num_heads, eps=eps,
                             compute_dtype=jnp.float32))
    assert out32.shape == (B, S, H)
    err32 = float(jnp.max(jnp.abs(out32.astype(jnp.float32) - ref)))
    assert err32 < 5e-3, f"f32 path error too large: {err32}"

    out_bf16 = jax.block_until_ready(
        siglip_encoder_layer(x, params, num_heads=num_heads, eps=eps))
    assert out_bf16.shape == (B, S, H)
    err_bf16 = float(jnp.max(jnp.abs(out_bf16.astype(jnp.float32) - ref)))
    assert err_bf16 < 3e-2, f"bf16 path error too large: {err_bf16}"

    # ---- case 2: unaligned S / inner exercising seq padding + key masking and
    #      the chunked-MLP reduction axis (S=27 -> pad 32, inner=200 -> pad 256) --
    B2, S2, H2, heads2, inner2 = 1, 27, 32, 4, 200
    params2 = make_params(k_p2, H2, inner2)
    x2 = jax.random.normal(k_x2, (B2, S2, H2), dtype=jnp.float32)
    ref2 = reference_forward(x2, params2, num_heads=heads2, eps=eps)
    out2 = jax.block_until_ready(
        siglip_encoder_layer(x2, params2, num_heads=heads2, eps=eps,
                             compute_dtype=jnp.float32,
                             seq_tile=16, inner_chunk=128))
    assert out2.shape == (B2, S2, H2)
    err2 = float(jnp.max(jnp.abs(out2.astype(jnp.float32) - ref2)))
    assert err2 < 5e-3, f"padded/chunked path error too large: {err2}"

    print("KERNEL_OK")
</pallas_src>

<mosaic_0001>
module attributes {stable_mosaic.version = 11 : i64} {
  func.func @_qkv_kernel(%arg0: i32, %arg1: i32, %arg2: memref<1x8x32xf32, #tpu.memory_space<vmem>>, %arg3: memref<1x32xf32, #tpu.memory_space<vmem>>, %arg4: memref<1x32xf32, #tpu.memory_space<vmem>>, %arg5: memref<32x32xf32, #tpu.memory_space<vmem>>, %arg6: memref<1x32xf32, #tpu.memory_space<vmem>>, %arg7: memref<32x32xf32, #tpu.memory_space<vmem>>, %arg8: memref<1x32xf32, #tpu.memory_space<vmem>>, %arg9: memref<32x32xf32, #tpu.memory_space<vmem>>, %arg10: memref<1x32xf32, #tpu.memory_space<vmem>>, %arg11: memref<1x8x32xf32, #tpu.memory_space<vmem>>, %arg12: memref<1x8x32xf32, #tpu.memory_space<vmem>>, %arg13: memref<1x8x32xf32, #tpu.memory_space<vmem>>) attributes {dimension_semantics = [#tpu.dimension_semantics<parallel>, #tpu.dimension_semantics<parallel>], iteration_bounds = array<i64: 1, 2>, scalar_prefetch = 0 : i64, scratch_operands = 0 : i64, tpu.core_type = #tpu.core_type<tc>, window_params = [{transform_indices = @transform_0, window_bounds = array<i64: 1, 8, 32>}, {pipeline_mode = #tpu.pipeline_mode<synchronous>, transform_indices = @transform_1, window_bounds = array<i64: 1, 32>}, {pipeline_mode = #tpu.pipeline_mode<synchronous>, transform_indices = @transform_2, window_bounds = array<i64: 1, 32>}, {pipeline_mode = #tpu.pipeline_mode<synchronous>, transform_indices = @transform_3, window_bounds = array<i64: 32, 32>}, {pipeline_mode = #tpu.pipeline_mode<synchronous>, transform_indices = @transform_4, window_bounds = array<i64: 1, 32>}, {pipeline_mode = #tpu.pipeline_mode<synchronous>, transform_indices = @transform_5, window_bounds = array<i64: 32, 32>}, {pipeline_mode = #tpu.pipeline_mode<synchronous>, transform_indices = @transform_6, window_bounds = array<i64: 1, 32>}, {pipeline_mode = #tpu.pipeline_mode<synchronous>, transform_indices = @transform_7, window_bounds = array<i64: 32, 32>}, {pipeline_mode = #tpu.pipeline_mode<synchronous>, transform_indices = @transform_8, window_bounds = array<i64: 1, 32>}, {transform_indices = @transform_9, window_bounds = array<i64: 1, 8, 32>}, {transform_indices = @transform_10, window_bounds = array<i64: 1, 8, 32>}, {transform_indices = @transform_11, window_bounds = array<i64: 1, 8, 32>}]} {
    %c0 = arith.constant 0 : index
    %c0_0 = arith.constant 0 : index
    %c0_1 = arith.constant 0 : index
    %0 = vector.load %arg2[%c0, %c0_0, %c0_1] : memref<1x8x32xf32, #tpu.memory_space<vmem>>, vector<1x8x32xf32>
    %1 = vector.shape_cast %0 : vector<1x8x32xf32> to vector<8x32xf32>
    %c0_2 = arith.constant 0 : index
    %c0_3 = arith.constant 0 : index
    %2 = vector.load %arg3[%c0_2, %c0_3] : memref<1x32xf32, #tpu.memory_space<vmem>>, vector<1x32xf32>
    %c0_4 = arith.constant 0 : index
    %c0_5 = arith.constant 0 : index
    %3 = vector.load %arg4[%c0_4, %c0_5] : memref<1x32xf32, #tpu.memory_space<vmem>>, vector<1x32xf32>
    %cst = arith.constant dense<0.000000e+00> : vector<8xf32>
    %4 = vector.multi_reduction <add>, %1, %cst [1] : vector<8x32xf32> to vector<8xf32>
    %5 = vector.shape_cast %4 : vector<8xf32> to vector<8x1xf32>
    %cst_6 = arith.constant 3.200000e+01 : f32
    %6 = vector.broadcast %cst_6 : f32 to vector<8x1xf32>
    %7 = arith.divf %5, %6 : vector<8x1xf32>
    %8 = vector.broadcast %7 : vector<8x1xf32> to vector<8x32xf32>
    %9 = arith.subf %1, %8 : vector<8x32xf32>
    %10 = arith.mulf %9, %9 : vector<8x32xf32>
    %cst_7 = arith.constant dense<0.000000e+00> : vector<8xf32>
    %11 = vector.multi_reduction <add>, %10, %cst_7 [1] : vector<8x32xf32> to vector<8xf32>
    %12 = vector.shape_cast %11 : vector<8xf32> to vector<8x1xf32>
    %cst_8 = arith.constant 3.200000e+01 : f32
    %13 = vector.broadcast %cst_8 : f32 to vector<8x1xf32>
    %14 = arith.divf %12, %13 : vector<8x1xf32>
    %15 = vector.broadcast %7 : vector<8x1xf32> to vector<8x32xf32>
    %16 = arith.subf %1, %15 : vector<8x32xf32>
    %cst_9 = arith.constant 9.99999997E-7 : f32
    %17 = vector.broadcast %cst_9 : f32 to vector<8x1xf32>
    %18 = arith.addf %14, %17 : vector<8x1xf32>
    %19 = math.rsqrt %18 : vector<8x1xf32>
    %20 = vector.broadcast %19 : vector<8x1xf32> to vector<8x32xf32>
    %21 = arith.mulf %16, %20 : vector<8x32xf32>
    %22 = vector.broadcast %2 : vector<1x32xf32> to vector<8x32xf32>
    %23 = arith.mulf %21, %22 : vector<8x32xf32>
    %24 = vector.broadcast %3 : vector<1x32xf32> to vector<8x32xf32>
    %25 = arith.addf %23, %24 : vector<8x32xf32>
    %c0_10 = arith.constant 0 : index
    %c0_11 = arith.constant 0 : index
    %26 = vector.load %arg5[%c0_10, %c0_11] : memref<32x32xf32, #tpu.memory_space<vmem>>, vector<32x32xf32>
    %cst_12 = arith.constant dense<0.000000e+00> : vector<8x32xf32>
    %27 = tpu.matmul %25, %26, %cst_12 {dimension_numbers = #tpu.dot_dimension_numbers<[1], [0], [0], [1], [0, 0, 1, 1], [], []>} : vector<8x32xf32>, vector<32x32xf32>, vector<8x32xf32> -> vector<8x32xf32>
    %c0_13 = arith.constant 0 : index
    %c0_14 = arith.constant 0 : index
    %28 = vector.load %arg6[%c0_13, %c0_14] : memref<1x32xf32, #tpu.memory_space<vmem>>, vector<1x32xf32>
    %29 = vector.broadcast %28 : vector<1x32xf32> to vector<8x32xf32>
    %30 = arith.addf %27, %29 : vector<8x32xf32>
    %c0_15 = arith.constant 0 : index
    %c0_16 = arith.constant 0 : index
    %31 = vector.load %arg7[%c0_15, %c0_16] : memref<32x32xf32, #tpu.memory_space<vmem>>, vector<32x32xf32>
    %cst_17 = arith.constant dense<0.000000e+00> : vector<8x32xf32>
    %32 = tpu.matmul %25, %31, %cst_17 {dimension_numbers = #tpu.dot_dimension_numbers<[1], [0], [0], [1], [0, 0, 1, 1], [], []>} : vector<8x32xf32>, vector<32x32xf32>, vector<8x32xf32> -> vector<8x32xf32>
    %c0_18 = arith.constant 0 : index
    %c0_19 = arith.constant 0 : index
    %33 = vector.load %arg8[%c0_18, %c0_19] : memref<1x32xf32, #tpu.memory_space<vmem>>, vector<1x32xf32>
    %34 = vector.broadcast %33 : vector<1x32xf32> to vector<8x32xf32>
    %35 = arith.addf %32, %34 : vector<8x32xf32>
    %c0_20 = arith.constant 0 : index
    %c0_21 = arith.constant 0 : index
    %36 = vector.load %arg9[%c0_20, %c0_21] : memref<32x32xf32, #tpu.memory_space<vmem>>, vector<32x32xf32>
    %cst_22 = arith.constant dense<0.000000e+00> : vector<8x32xf32>
    %37 = tpu.matmul %25, %36, %cst_22 {dimension_numbers = #tpu.dot_dimension_numbers<[1], [0], [0], [1], [0, 0, 1, 1], [], []>} : vector<8x32xf32>, vector<32x32xf32>, vector<8x32xf32> -> vector<8x32xf32>
    %c0_23 = arith.constant 0 : index
    %c0_24 = arith.constant 0 : index
    %38 = vector.load %arg10[%c0_23, %c0_24] : memref<1x32xf32, #tpu.memory_space<vmem>>, vector<1x32xf32>
    %39 = vector.broadcast %38 : vector<1x32xf32> to vector<8x32xf32>
    %40 = arith.addf %37, %39 : vector<8x32xf32>
    %cst_25 = arith.constant 0.353553385 : f32
    %41 = vector.broadcast %cst_25 : f32 to vector<8x32xf32>
    %42 = arith.mulf %30, %41 : vector<8x32xf32>
    %c0_26 = arith.constant 0 : index
    %c0_27 = arith.constant 0 : index
    %c0_28 = arith.constant 0 : index
    %43 = vector.load %arg11[%c0_26, %c0_27, %c0_28] : memref<1x8x32xf32, #tpu.memory_space<vmem>>, vector<1x8x32xf32>
    %44 = vector.shape_cast %43 : vector<1x8x32xf32> to vector<8x32xf32>
    %45 = vector.shape_cast %42 : vector<8x32xf32> to vector<1x8x32xf32>
    tpu.vector_store %arg11[%c0_26, %c0_27, %c0_28], %45 {strides = array<i32>} : memref<1x8x32xf32, #tpu.memory_space<vmem>>, vector<1x8x32xf32>,
    %c0_29 = arith.constant 0 : index
    %c0_30 = arith.constant 0 : index
    %c0_31 = arith.constant 0 : index
    %46 = vector.load %arg12[%c0_29, %c0_30, %c0_31] : memref<1x8x32xf32, #tpu.memory_space<vmem>>, vector<1x8x32xf32>
    %47 = vector.shape_cast %46 : vector<1x8x32xf32> to vector<8x32xf32>
    %48 = vector.shape_cast %35 : vector<8x32xf32> to vector<1x8x32xf32>
    tpu.vector_store %arg12[%c0_29, %c0_30, %c0_31], %48 {strides = array<i32>} : memref<1x8x32xf32, #tpu.memory_space<vmem>>, vector<1x8x32xf32>,
    %c0_32 = arith.constant 0 : index
    %c0_33 = arith.constant 0 : index
    %c0_34 = arith.constant 0 : index
    %49 = vector.load %arg13[%c0_32, %c0_33, %c0_34] : memref<1x8x32xf32, #tpu.memory_space<vmem>>, vector<1x8x32xf32>
    %50 = vector.shape_cast %49 : vector<1x8x32xf32> to vector<8x32xf32>
    %51 = vector.shape_cast %40 : vector<8x32xf32> to vector<1x8x32xf32>
    tpu.vector_store %arg13[%c0_32, %c0_33, %c0_34], %51 {strides = array<i32>} : memref<1x8x32xf32, #tpu.memory_space<vmem>>, vector<1x8x32xf32>,
    return
  }
  func.func @transform_0(%arg0: i32, %arg1: i32) -> (i32, i32, i32) {
    %c0_i32 = arith.constant 0 : i32
    %c0_i32_0 = arith.constant 0 : i32
    return %arg1, %arg0, %c0_i32 : i32, i32, i32
  }
  func.func @transform_1(%arg0: i32, %arg1: i32) -> (i32, i32) {
    %c0_i32 = arith.constant 0 : i32
    %c0_i32_0 = arith.constant 0 : i32
    %c0_i32_1 = arith.constant 0 : i32
    return %c0_i32, %c0_i32_0 : i32, i32
  }
  func.func @transform_2(%arg0: i32, %arg1: i32) -> (i32, i32) {
    %c0_i32 = arith.constant 0 : i32
    %c0_i32_0 = arith.constant 0 : i32
    %c0_i32_1 = arith.constant 0 : i32
    return %c0_i32, %c0_i32_0 : i32, i32
  }
  func.func @transform_3(%arg0: i32, %arg1: i32) -> (i32, i32) {
    %c0_i32 = arith.constant 0 : i32
    %c0_i32_0 = arith.constant 0 : i32
    %c0_i32_1 = arith.constant 0 : i32
    return %c0_i32, %c0_i32_0 : i32, i32
  }
  func.func @transform_4(%arg0: i32, %arg1: i32) -> (i32, i32) {
    %c0_i32 = arith.constant 0 : i32
    %c0_i32_0 = arith.constant 0 : i32
    %c0_i32_1 = arith.constant 0 : i32
    return %c0_i32, %c0_i32_0 : i32, i32
  }
  func.func @transform_5(%arg0: i32, %arg1: i32) -> (i32, i32) {
    %c0_i32 = arith.constant 0 : i32
    %c0_i32_0 = arith.constant 0 : i32
    %c0_i32_1 = arith.constant 0 : i32
    return %c0_i32, %c0_i32_0 : i32, i32
  }
  func.func @transform_6(%arg0: i32, %arg1: i32) -> (i32, i32) {
    %c0_i32 = arith.constant 0 : i32
    %c0_i32_0 = arith.constant 0 : i32
    %c0_i32_1 = arith.constant 0 : i32
    return %c0_i32, %c0_i32_0 : i32, i32
  }
  func.func @transform_7(%arg0: i32, %arg1: i32) -> (i32, i32) {
    %c0_i32 = arith.constant 0 : i32
    %c0_i32_0 = arith.constant 0 : i32
    %c0_i32_1 = arith.constant 0 : i32
    return %c0_i32, %c0_i32_0 : i32, i32
  }
  func.func @transform_8(%arg0: i32, %arg1: i32) -> (i32, i32) {
    %c0_i32 = arith.constant 0 : i32
    %c0_i32_0 = arith.constant 0 : i32
    %c0_i32_1 = arith.constant 0 : i32
    return %c0_i32, %c0_i32_0 : i32, i32
  }
  func.func @transform_9(%arg0: i32, %arg1: i32) -> (i32, i32, i32) {
    %c0_i32 = arith.constant 0 : i32
    %c0_i32_0 = arith.constant 0 : i32
    return %arg1, %arg0, %c0_i32 : i32, i32, i32
  }
  func.func @transform_10(%arg0: i32, %arg1: i32) -> (i32, i32, i32) {
    %c0_i32 = arith.constant 0 : i32
    %c0_i32_0 = arith.constant 0 : i32
    return %arg1, %arg0, %c0_i32 : i32, i32, i32
  }
  func.func @transform_11(%arg0: i32, %arg1: i32) -> (i32, i32, i32) {
    %c0_i32 = arith.constant 0 : i32
    %c0_i32_0 = arith.constant 0 : i32
    return %arg1, %arg0, %c0_i32 : i32, i32, i32
  }
}

</mosaic_0001>

<llo_original>
// kernel: tpu_custom_call.1
$region0: #{tpu_custom_call.1}
  #allocation0 [shape = 'u32[]', space=smem, size = 0x4, offset = 0x4, fixed_abs, tag = 'smem constant byte address 0x4 - core index']
  #allocation1 [shape = 'u32[144,128]{1,0:T(1,128)}', space=vmem, size = 0x12000, scoped, tag = 'internal scratch']
  %s0 = inlined_call_operand.hbm [shape: f32[2,8,32], index: 0, kind: input, shape index: {}]
  %s1 = inlined_call_operand.vmem [shape: f32[1,32], index: 1, kind: input, shape index: {}]
  %s2 = inlined_call_operand.vmem [shape: f32[1,32], index: 2, kind: input, shape index: {}]
  %s3 = inlined_call_operand.hbm [shape: f32[32,32], index: 3, kind: input, shape index: {}]
  %s4 = inlined_call_operand.vmem [shape: f32[1,32], index: 4, kind: input, shape index: {}]
  %s5 = inlined_call_operand.hbm [shape: f32[32,32], index: 5, kind: input, shape index: {}]
  %s6 = inlined_call_operand.vmem [shape: f32[1,32], index: 6, kind: input, shape index: {}]
  %s7 = inlined_call_operand.hbm [shape: f32[32,32], index: 7, kind: input, shape index: {}]
  %s8 = inlined_call_operand.vmem [shape: f32[1,32], index: 8, kind: input, shape index: {}]
  %s9 = inlined_call_operand.hbm [shape: f32[2,8,32], index: 9, kind: output, shape index: {0}]
  %s10 = inlined_call_operand.hbm [shape: f32[2,8,32], index: 10, kind: output, shape index: {1}]
  %s11 = inlined_call_operand.hbm [shape: f32[2,8,32], index: 11, kind: output, shape index: {2}]
  %12 = xla_tuple %s9, %s10, %s11
  %s13 = sld [smem:[#allocation0]]
  $region101: #{tpu_custom_call.1} parent=0
    _
  %s15 = ssub.s32 1, %s13
  %s16 = scalar_select 0, %s15, %s13
  $region1: #{tpu_custom_call.1} parent=0
    #allocation2 [shape = 'u8[8192]{0}', space=vmem, size = 0x2000, scoped, tag = 'input window, operand 0']
    #allocation3 [shape = 's32[2]{0}', space=sflag, size = 0x8, scoped, tag = 'scoped memory for tpu_custom_call.1']
    #allocation4 [shape = 's32[2]{0}', space=sflag, size = 0x8, scoped, tag = 'scoped memory for tpu_custom_call.1']
    #allocation5 [shape = 'u8[16384]{0}', space=vmem, size = 0x4000, scoped, tag = 'input window, operand 3, single buffered']
    #allocation6 [shape = 's32[1]{0}', space=sflag, size = 0x4, scoped, tag = 'scoped memory for tpu_custom_call.1']
    #allocation7 [shape = 'u8[16384]{0}', space=vmem, size = 0x4000, scoped, tag = 'input window, operand 5, single buffered']
    #allocation8 [shape = 'u8[16384]{0}', space=vmem, size = 0x4000, scoped, tag = 'input window, operand 7, single buffered']
    #allocation9 [shape = 's32[1]{0}', space=sflag, size = 0x4, scoped, tag = 'scoped memory for tpu_custom_call.1']
    #allocation10 [shape = 'u8[8192]{0}', space=vmem, size = 0x2000, scoped, tag = 'output window, operand 0']
    #allocation11 [shape = 'u8[8192]{0}', space=vmem, size = 0x2000, scoped, tag = 'output window, operand 1']
    #allocation12 [shape = 's32[2]{0}', space=sflag, size = 0x8, scoped, tag = 'scoped memory for tpu_custom_call.1']
    #allocation13 [shape = 'u8[8192]{0}', space=vmem, size = 0x2000, scoped, tag = 'output window, operand 2']
    %17 = vsyncpa [#allocation3], 0
    %s18 = scalar_lea.sflag [#allocation3], 1
    %19 = vsyncpa %s18, 0
    %20 = vsyncpa [#allocation6], 0
    %21 = vsyncpa [#allocation9], 0
    %22 = vsyncpa [#allocation4], 0
    %s23 = scalar_lea.sflag [#allocation4], 1
    %24 = vsyncpa %s23, 0
    %25 = vsyncpa [#allocation12], 0
    %s26 = scalar_lea.sflag [#allocation12], 1
    %27 = vsyncpa %s26, 0
    loop: start=0, step=1, limit=4
    $region2: #{tpu_custom_call.1} parent=1 // loop_pre_header
      _
    $region3: #{tpu_custom_call.1} parent=1 // loop_header
      %s29 = sphi 0, %s33
      %p30 = scmp.ge.s32.totalorder %s29, 4
      %s36 = sphi 0, %s48
      %s37 = sphi 0, %s44
      %s38 = sphi 0, %s36
      %s39 = sphi 0, %s37
      %s40 = sphi 0, %s38
      %s41 = sphi 0, %s39
      %s53 = sphi 0, %s55
      %s56 = sphi 0, %s53
      %s57 = sphi 0, %s56
      %s73 = sphi 0, %s57
      %s77 = sphi 0, %s77
      %s79 = sphi 0, %s77
      %s80 = sphi 0, %s79
      %s94 = sphi 0, %s80
      %s98 = sphi 0, %s98
      %s100 = sphi 0, %s98
      %s101 = sphi 0, %s100
      %s115 = sphi 0, %s101
      %s119 = sphi 0, %s119
      %s121 = sphi 0, %s119
      %s122 = sphi 0, %s121
      %s136 = sphi 0, %s122
      %s140 = sphi 0, %s140
      %s142 = sphi 0, %s140
      %s143 = sphi 0, %s142
      %s157 = sphi 0, %s143
      %s161 = sphi 0, %s161
      %s163 = sphi 0, %s161
      %s164 = sphi 0, %s163
      %s178 = sphi 0, %s164
      %s182 = sphi 0, %s182
      %s184 = sphi 0, %s182
      %s185 = sphi 0, %s184
      %s199 = sphi 0, %s185
      %s203 = sphi 0, %s203
      %s205 = sphi 0, %s203
      %s206 = sphi 0, %s205
      %s220 = sphi 0, %s206
      %s224 = sphi 0, %s224
      %s226 = sphi 0, %s224
      %s227 = sphi 0, %s226
      %s241 = sphi 0, %s227
      %s249 = sphi 0, %s251
      %s252 = sphi 0, %s249
      %s253 = sphi 0, %s252
      %s269 = sphi 0, %s253
      %s277 = sphi 0, %s279
      %s280 = sphi 0, %s277
      %s281 = sphi 0, %s280
      %s297 = sphi 0, %s281
      %s305 = sphi 0, %s307
      %s308 = sphi 0, %s305
      %s309 = sphi 0, %s308
      %s325 = sphi 0, %s309
    $region4: #{tpu_custom_call.1} parent=1 // loop_header_branch
      %32 = sbr.rel (%p30) target = $region8
    $region5: #{tpu_custom_call.1} parent=1 // loop_body
      %s34 = ssub.s32 %s29, 1
      %s35 = ssub.s32 %s29, 2
      %s42 = sadd.s32 1, %s37
      %p43 = scmp.ge.s32.totalorder %s42, 2
      %s44 = scalar_select %p43, 0, %s42
      %s45 = sadd.s32 1, %s36
      %s46 = scalar_select %p43, %s45, %s36
      %p47 = scmp.ge.s32.totalorder %s46, 1
      %s48 = scalar_select %p47, 0, %s46
      %s49 = ssub.s32 %s37, %s44
      %s50 = ssub.s32 %s36, %s48
      %s51 = sor.u32 %s49, %s50
      %p52 = scmp.eq.s32.totalorder %s51, 0
      %s54 = sadd.s32 %s53, 1
      %s55 = scalar_select %p52, %s53, %s54
      %p58 = pneg %p52
      %p59 = scmp.eq.s32.totalorder %s29, 1
      %p60 = por %p58, %p59
      %p61 = scmp.ne.s32.totalorder %s53, %s56
      %p62 = scmp.eq.s32.totalorder %s29, 0
      %p63 = por %p61, %p62
      %p64 = scmp.ne.s32.totalorder %s53, %s56
      %p65 = scmp.eq.s32.totalorder %s34, 1
      %p66 = por %p64, %p65
      %p67 = scmp.ne.s32.totalorder %s56, %s57
      %p68 = scmp.eq.s32.totalorder %s34, 0
      %p69 = por %p67, %p68
      %p70 = scmp.ne.s32.totalorder %s56, %s57
      %p71 = scmp.eq.s32.totalorder %s35, 1
      %p72 = por %p70, %p71
      %p74 = scmp.ne.s32.totalorder %s57, %s73
      %p75 = scmp.eq.s32.totalorder %s35, 0
      %p76 = por %p74, %p75
      %s78 = sadd.s32 %s77, 1
      %p81 = scmp.eq.s32.totalorder %s29, 1
      %p82 = scmp.ne.s32.totalorder %s77, %s79
      %p83 = scmp.eq.s32.totalorder %s29, 0
      %p84 = por %p82, %p83
      %p85 = scmp.ne.s32.totalorder %s77, %s79
      %p86 = scmp.eq.s32.totalorder %s34, 1
      %p87 = por %p85, %p86
      %p88 = scmp.ne.s32.totalorder %s79, %s80
      %p89 = scmp.eq.s32.totalorder %s34, 0
      %p90 = por %p88, %p89
      %p91 = scmp.ne.s32.totalorder %s79, %s80
      %p92 = scmp.eq.s32.totalorder %s35, 1
      %p93 = por %p91, %p92
      %p95 = scmp.ne.s32.totalorder %s80, %s94
      %p96 = scmp.eq.s32.totalorder %s35, 0
      %p97 = por %p95, %p96
      %s99 = sadd.s32 %s98, 1
      %p102 = scmp.eq.s32.totalorder %s29, 1
      %p103 = scmp.ne.s32.totalorder %s98, %s100
      %p104 = scmp.eq.s32.totalorder %s29, 0
      %p105 = por %p103, %p104
      %p106 = scmp.ne.s32.totalorder %s98, %s100
      %p107 = scmp.eq.s32.totalorder %s34, 1
      %p108 = por %p106, %p107
      %p109 = scmp.ne.s32.totalorder %s100, %s101
      %p110 = scmp.eq.s32.totalorder %s34, 0
      %p111 = por %p109, %p110
      %p112 = scmp.ne.s32.totalorder %s100, %s101
      %p113 = scmp.eq.s32.totalorder %s35, 1
      %p114 = por %p112, %p113
      %p116 = scmp.ne.s32.totalorder %s101, %s115
      %p117 = scmp.eq.s32.totalorder %s35, 0
      %p118 = por %p116, %p117
      %s120 = sadd.s32 %s119, 1
      %p123 = scmp.eq.s32.totalorder %s29, 1
      %p124 = scmp.ne.s32.totalorder %s119, %s121
      %p125 = scmp.eq.s32.totalorder %s29, 0
      %p126 = por %p124, %p125
      %p127 = scmp.ne.s32.totalorder %s119, %s121
      %p128 = scmp.eq.s32.totalorder %s34, 1
      %p129 = por %p127, %p128
      %p130 = scmp.ne.s32.totalorder %s121, %s122
      %p131 = scmp.eq.s32.totalorder %s34, 0
      %p132 = por %p130, %p131
      %p133 = scmp.ne.s32.totalorder %s121, %s122
      %p134 = scmp.eq.s32.totalorder %s35, 1
      %p135 = por %p133, %p134
      %p137 = scmp.ne.s32.totalorder %s122, %s136
      %p138 = scmp.eq.s32.totalorder %s35, 0
      %p139 = por %p137, %p138
      %s141 = sadd.s32 %s140, 1
      %p144 = scmp.eq.s32.totalorder %s29, 1
      %p145 = scmp.ne.s32.totalorder %s140, %s142
      %p146 = scmp.eq.s32.totalorder %s29, 0
      %p147 = por %p145, %p146
      %p148 = scmp.ne.s32.totalorder %s140, %s142
      %p149 = scmp.eq.s32.totalorder %s34, 1
      %p150 = por %p148, %p149
      %p151 = scmp.ne.s32.totalorder %s142, %s143
      %p152 = scmp.eq.s32.totalorder %s34, 0
      %p153 = por %p151, %p152
      %p154 = scmp.ne.s32.totalorder %s142, %s143
      %p155 = scmp.eq.s32.totalorder %s35, 1
      %p156 = por %p154, %p155
      %p158 = scmp.ne.s32.totalorder %s143, %s157
      %p159 = scmp.eq.s32.totalorder %s35, 0
      %p160 = por %p158, %p159
      %s162 = sadd.s32 %s161, 1
      %p165 = scmp.eq.s32.totalorder %s29, 1
      %p166 = scmp.ne.s32.totalorder %s161, %s163
      %p167 = scmp.eq.s32.totalorder %s29, 0
      %p168 = por %p166, %p167
      %p169 = scmp.ne.s32.totalorder %s161, %s163
      %p170 = scmp.eq.s32.totalorder %s34, 1
      %p171 = por %p169, %p170
      %p172 = scmp.ne.s32.totalorder %s163, %s164
      %p173 = scmp.eq.s32.totalorder %s34, 0
      %p174 = por %p172, %p173
      %p175 = scmp.ne.s32.totalorder %s163, %s164
      %p176 = scmp.eq.s32.totalorder %s35, 1
      %p177 = por %p175, %p176
      %p179 = scmp.ne.s32.totalorder %s164, %s178
      %p180 = scmp.eq.s32.totalorder %s35, 0
      %p181 = por %p179, %p180
      %s183 = sadd.s32 %s182, 1
      %p186 = scmp.eq.s32.totalorder %s29, 1
      %p187 = scmp.ne.s32.totalorder %s182, %s184
      %p188 = scmp.eq.s32.totalorder %s29, 0
      %p189 = por %p187, %p188
      %p190 = scmp.ne.s32.totalorder %s182, %s184
      %p191 = scmp.eq.s32.totalorder %s34, 1
      %p192 = por %p190, %p191
      %p193 = scmp.ne.s32.totalorder %s184, %s185
      %p194 = scmp.eq.s32.totalorder %s34, 0
      %p195 = por %p193, %p194
      %p196 = scmp.ne.s32.totalorder %s184, %s185
      %p197 = scmp.eq.s32.totalorder %s35, 1
      %p198 = por %p196, %p197
      %p200 = scmp.ne.s32.totalorder %s185, %s199
      %p201 = scmp.eq.s32.totalorder %s35, 0
      %p202 = por %p200, %p201
      %s204 = sadd.s32 %s203, 1
      %p207 = scmp.eq.s32.totalorder %s29, 1
      %p208 = scmp.ne.s32.totalorder %s203, %s205
      %p209 = scmp.eq.s32.totalorder %s29, 0
      %p210 = por %p208, %p209
      %p211 = scmp.ne.s32.totalorder %s203, %s205
      %p212 = scmp.eq.s32.totalorder %s34, 1
      %p213 = por %p211, %p212
      %p214 = scmp.ne.s32.totalorder %s205, %s206
      %p215 = scmp.eq.s32.totalorder %s34, 0
      %p216 = por %p214, %p215
      %p217 = scmp.ne.s32.totalorder %s205, %s206
      %p218 = scmp.eq.s32.totalorder %s35, 1
      %p219 = por %p217, %p218
      %p221 = scmp.ne.s32.totalorder %s206, %s220
      %p222 = scmp.eq.s32.totalorder %s35, 0
      %p223 = por %p221, %p222
      %s225 = sadd.s32 %s224, 1
      %p228 = scmp.eq.s32.totalorder %s29, 1
      %p229 = scmp.ne.s32.totalorder %s224, %s226
      %p230 = scmp.eq.s32.totalorder %s29, 0
      %p231 = por %p229, %p230
      %p232 = scmp.ne.s32.totalorder %s224, %s226
      %p233 = scmp.eq.s32.totalorder %s34, 1
      %p234 = por %p232, %p233
      %p235 = scmp.ne.s32.totalorder %s226, %s227
      %p236 = scmp.eq.s32.totalorder %s34, 0
      %p237 = por %p235, %p236
      %p238 = scmp.ne.s32.totalorder %s226, %s227
      %p239 = scmp.eq.s32.totalorder %s35, 1
      %p240 = por %p238, %p239
      %p242 = scmp.ne.s32.totalorder %s227, %s241
      %p243 = scmp.eq.s32.totalorder %s35, 0
      %p244 = por %p242, %p243
      %s245 = ssub.s32 %s37, %s44
      %s246 = ssub.s32 %s36, %s48
      %s247 = sor.u32 %s245, %s246
      %p248 = scmp.eq.s32.totalorder %s247, 0
      %s250 = sadd.s32 %s249, 1
      %s251 = scalar_select %p248, %s249, %s250
      %p254 = pneg %p248
      %p255 = scmp.eq.s32.totalorder %s29, 1
      %p256 = por %p254, %p255
      %p257 = scmp.ne.s32.totalorder %s249, %s252
      %p258 = scmp.eq.s32.totalorder %s29, 0
      %p259 = por %p257, %p258
      %p260 = scmp.ne.s32.totalorder %s249, %s252
      %p261 = scmp.eq.s32.totalorder %s34, 1
      %p262 = por %p260, %p261
      %p263 = scmp.ne.s32.totalorder %s252, %s253
      %p264 = scmp.eq.s32.totalorder %s34, 0
      %p265 = por %p263, %p264
      %p266 = scmp.ne.s32.totalorder %s252, %s253
      %p267 = scmp.eq.s32.totalorder %s35, 1
      %p268 = por %p266, %p267
      %p270 = scmp.ne.s32.totalorder %s253, %s269
      %p271 = scmp.eq.s32.totalorder %s35, 0
      %p272 = por %p270, %p271
      %s273 = ssub.s32 %s37, %s44
      %s274 = ssub.s32 %s36, %s48
      %s275 = sor.u32 %s273, %s274
      %p276 = scmp.eq.s32.totalorder %s275, 0
      %s278 = sadd.s32 %s277, 1
      %s279 = scalar_select %p276, %s277, %s278
      %p282 = pneg %p276
      %p283 = scmp.eq.s32.totalorder %s29, 1
      %p284 = por %p282, %p283
      %p285 = scmp.ne.s32.totalorder %s277, %s280
      %p286 = scmp.eq.s32.totalorder %s29, 0
      %p287 = por %p285, %p286
      %p288 = scmp.ne.s32.totalorder %s277, %s280
      %p289 = scmp.eq.s32.totalorder %s34, 1
      %p290 = por %p288, %p289
      %p291 = scmp.ne.s32.totalorder %s280, %s281
      %p292 = scmp.eq.s32.totalorder %s34, 0
      %p293 = por %p291, %p292
      %p294 = scmp.ne.s32.totalorder %s280, %s281
      %p295 = scmp.eq.s32.totalorder %s35, 1
      %p296 = por %p294, %p295
      %p298 = scmp.ne.s32.totalorder %s281, %s297
      %p299 = scmp.eq.s32.totalorder %s35, 0
      %p300 = por %p298, %p299
      %s301 = ssub.s32 %s37, %s44
      %s302 = ssub.s32 %s36, %s48
      %s303 = sor.u32 %s301, %s302
      %p304 = scmp.eq.s32.totalorder %s303, 0
      %s306 = sadd.s32 %s305, 1
      %s307 = scalar_select %p304, %s305, %s306
      %p310 = pneg %p304
      %p311 = scmp.eq.s32.totalorder %s29, 1
      %p312 = por %p310, %p311
      %p313 = scmp.ne.s32.totalorder %s305, %s308
      %p314 = scmp.eq.s32.totalorder %s29, 0
      %p315 = por %p313, %p314
      %p316 = scmp.ne.s32.totalorder %s305, %s308
      %p317 = scmp.eq.s32.totalorder %s34, 1
      %p318 = por %p316, %p317
      %p319 = scmp.ne.s32.totalorder %s308, %s309
      %p320 = scmp.eq.s32.totalorder %s34, 0
      %p321 = por %p319, %p320
      %p322 = scmp.ne.s32.totalorder %s308, %s309
      %p323 = scmp.eq.s32.totalorder %s35, 1
      %p324 = por %p322, %p323
      %p326 = scmp.ne.s32.totalorder %s309, %s325
      %p327 = scmp.eq.s32.totalorder %s35, 0
      %p328 = por %p326, %p327
      %p329 = scmp.le.s32.totalorder 1, %s29
      %p330 = scmp.lt.s32.totalorder %s29, 3
      %p331 = pnand %p329, %p330
      %p332 = pneg %p331
      // Predicated region
      $region9: #{tpu_custom_call.1} parent=5 // pred_check
        _
      $region10: #{tpu_custom_call.1} parent=5 // pred_check_branch
        %334 = sbr.rel (%p331) target = $region12
      $region11: #{tpu_custom_call.1} parent=5 // pred_region
        %s335 = ssub.s32 %s29, 1
        // Predicated region
        $region13: #{tpu_custom_call.1} parent=11 // pred_check
          %p336 = pneg %p90
        $region14: #{tpu_custom_call.1} parent=11 // pred_check_branch
          %338 = sbr.rel (%p336) target = $region16
        $region15: #{tpu_custom_call.1} parent=11 // pred_region
          _
        $region16: #{tpu_custom_call.1} parent=11 // pred_fallthru
          _
        // Predicated region
        $region17: #{tpu_custom_call.1} parent=11 // pred_check
          %p339 = pneg %p111
        $region18: #{tpu_custom_call.1} parent=11 // pred_check_branch
          %341 = sbr.rel (%p339) target = $region20
        $region19: #{tpu_custom_call.1} parent=11 // pred_region
          _
        $region20: #{tpu_custom_call.1} parent=11 // pred_fallthru
          _
        // Predicated region
        $region21: #{tpu_custom_call.1} parent=11 // pred_check
          %p342 = pneg %p132
        $region22: #{tpu_custom_call.1} parent=11 // pred_check_branch
          %344 = sbr.rel (%p342) target = $region24
        $region23: #{tpu_custom_call.1} parent=11 // pred_region
          %s346 = ssub.s32 512, 512
          %347 = vsyncadd [#allocation6], %s346
          %s348 = sshll.u32 [#allocation5], 4
          %s349 = int_to_ptr.vmem [resolvable:$true] %s348
          %354 = dma.hbm_to_vmem [thread:$0]  %s3, 512, %s349, [#allocation6], 128, 128, 8
        $region24: #{tpu_custom_call.1} parent=11 // pred_fallthru
          _
        // Predicated region
        $region25: #{tpu_custom_call.1} parent=11 // pred_check
          %p355 = pneg %p153
        $region26: #{tpu_custom_call.1} parent=11 // pred_check_branch
          %357 = sbr.rel (%p355) target = $region28
        $region27: #{tpu_custom_call.1} parent=11 // pred_region
          _
        $region28: #{tpu_custom_call.1} parent=11 // pred_fallthru
          _
        // Predicated region
        $region29: #{tpu_custom_call.1} parent=11 // pred_check
          %p358 = pneg %p174
        $region30: #{tpu_custom_call.1} parent=11 // pred_check_branch
          %360 = sbr.rel (%p358) target = $region32
        $region31: #{tpu_custom_call.1} parent=11 // pred_region
          %s362 = ssub.s32 512, 512
          %363 = vsyncadd [#allocation6], %s362
          %s364 = sshll.u32 [#allocation7], 4
          %s365 = int_to_ptr.vmem [resolvable:$true] %s364
          %370 = dma.hbm_to_vmem [thread:$0]  %s5, 512, %s365, [#allocation6], 128, 128, 8
        $region32: #{tpu_custom_call.1} parent=11 // pred_fallthru
          _
        // Predicated region
        $region33: #{tpu_custom_call.1} parent=11 // pred_check
          %p371 = pneg %p195
        $region34: #{tpu_custom_call.1} parent=11 // pred_check_branch
          %373 = sbr.rel (%p371) target = $region36
        $region35: #{tpu_custom_call.1} parent=11 // pred_region
          _
        $region36: #{tpu_custom_call.1} parent=11 // pred_fallthru
          _
        // Predicated region
        $region37: #{tpu_custom_call.1} parent=11 // pred_check
          %p374 = pneg %p216
        $region38: #{tpu_custom_call.1} parent=11 // pred_check_branch
          %376 = sbr.rel (%p374) target = $region40
        $region39: #{tpu_custom_call.1} parent=11 // pred_region
          %s378 = ssub.s32 512, 512
          %379 = vsyncadd [#allocation9], %s378
          %s380 = sshll.u32 [#allocation8], 4
          %s381 = int_to_ptr.vmem [resolvable:$true] %s380
          %386 = dma.hbm_to_vmem [thread:$0]  %s7, 512, %s381, [#allocation9], 128, 128, 8
        $region40: #{tpu_custom_call.1} parent=11 // pred_fallthru
          _
        // Predicated region
        $region41: #{tpu_custom_call.1} parent=11 // pred_check
          %p387 = pneg %p237
        $region42: #{tpu_custom_call.1} parent=11 // pred_check_branch
          %389 = sbr.rel (%p387) target = $region44
        $region43: #{tpu_custom_call.1} parent=11 // pred_region
          _
        $region44: #{tpu_custom_call.1} parent=11 // pred_fallthru
          _
      $region12: #{tpu_custom_call.1} parent=5 // pred_fallthru
        _
      %p390 = scmp.lt.s32.totalorder %s29, 2
      // Predicated region
      $region45: #{tpu_custom_call.1} parent=5 // pred_check
        %p391 = pneg %p390
      $region46: #{tpu_custom_call.1} parent=5 // pred_check_branch
        %393 = sbr.rel (%p391) target = $region48
      $region47: #{tpu_custom_call.1} parent=5 // pred_region
        // Predicated region
        $region49: #{tpu_custom_call.1} parent=47 // pred_check
          %p394 = pneg %p63
        $region50: #{tpu_custom_call.1} parent=47 // pred_check_branch
          %396 = sbr.rel (%p394) target = $region52
        $region51: #{tpu_custom_call.1} parent=47 // pred_region
          %s397 = sand.u32 %s53, 1
          %s398 = scalar_lea.sflag [#allocation3], %s397
          %s399 = sand.u32 %s53, 1
          %s400 = smul.addr %s399, 8
          %s401 = scalar_lea.vmem [#allocation2], %s400
          %s403 = ssub.s32 128, 128
          %404 = vsyncadd %s398, %s403
          %s405 = sadd.s32 %s36, %s37
          %s406 = smul.addr %s405, 128
          %s407 = scalar_lea.hbm %s0, %s406
          %s409 = sshll.u32 %s401, 4
          %s410 = int_to_ptr.vmem [resolvable:$true] %s409
          %412 = dma.hbm_to_vmem [thread:$0]  %s407, 128, %s410, %s398
        $region52: #{tpu_custom_call.1} parent=47 // pred_fallthru
          _
      $region48: #{tpu_custom_call.1} parent=5 // pred_fallthru
        _
      %p413 = scmp.le.s32.totalorder 1, %s29
      %p414 = scmp.lt.s32.totalorder %s29, 3
      %p415 = pnand %p413, %p414
      %p416 = pneg %p415
      // Predicated region
      $region53: #{tpu_custom_call.1} parent=5 // pred_check
        _
      $region54: #{tpu_custom_call.1} parent=5 // pred_check_branch
        %418 = sbr.rel (%p415) target = $region56
      $region55: #{tpu_custom_call.1} parent=5 // pred_region
        %s419 = ssub.s32 %s29, 1
        %s420 = sand.u32 %s56, 1
        %s421 = scalar_lea.sflag [#allocation3], %s420
        %s422 = sand.u32 %s56, 1
        %s423 = smul.addr %s422, 8
        %s424 = scalar_lea.vmem [#allocation2], %s423
        // Predicated region
        $region57: #{tpu_custom_call.1} parent=55 // pred_check
          %p425 = pneg %p69
        $region58: #{tpu_custom_call.1} parent=55 // pred_check_branch
          %427 = sbr.rel (%p425) target = $region60
        $region59: #{tpu_custom_call.1} parent=55 // pred_region
          %428 = dma.done %s421, 128
        $region60: #{tpu_custom_call.1} parent=55 // pred_fallthru
          _
        // Predicated region
        $region61: #{tpu_custom_call.1} parent=55 // pred_check
          %p429 = pneg %p132
        $region62: #{tpu_custom_call.1} parent=55 // pred_check_branch
          %431 = sbr.rel (%p429) target = $region64
        $region63: #{tpu_custom_call.1} parent=55 // pred_region
          %432 = dma.done [#allocation6], 512
        $region64: #{tpu_custom_call.1} parent=55 // pred_fallthru
          _
        // Predicated region
        $region65: #{tpu_custom_call.1} parent=55 // pred_check
          %p433 = pneg %p174
        $region66: #{tpu_custom_call.1} parent=55 // pred_check_branch
          %435 = sbr.rel (%p433) target = $region68
        $region67: #{tpu_custom_call.1} parent=55 // pred_region
          %436 = dma.done [#allocation6], 512
        $region68: #{tpu_custom_call.1} parent=55 // pred_fallthru
          _
        // Predicated region
        $region69: #{tpu_custom_call.1} parent=55 // pred_check
          %p437 = pneg %p216
        $region70: #{tpu_custom_call.1} parent=55 // pred_check_branch
          %439 = sbr.rel (%p437) target = $region72
        $region71: #{tpu_custom_call.1} parent=55 // pred_region
          %440 = dma.done [#allocation9], 512
        $region72: #{tpu_custom_call.1} parent=55 // pred_fallthru
          _
        %s441 = sand.u32 %s56, 1
        %s442 = scalar_lea.sflag [#allocation3], %s441
        %s443 = sand.u32 %s56, 1
        %s444 = smul.addr %s443, 8
        %s445 = scalar_lea.vmem [#allocation2], %s444
        %p446 = pneg %p69
        %p447 = pneg %p66
        %p448 = pneg %p90
        %p449 = pneg %p87
        %p450 = pneg %p111
        %p451 = pneg %p108
        %p452 = pneg %p132
        %p453 = pneg %p129
        %p454 = pneg %p153
        %p455 = pneg %p150
        %p456 = pneg %p174
        %p457 = pneg %p171
        %p458 = pneg %p195
        %p459 = pneg %p192
        %p460 = pneg %p216
        %p461 = pneg %p213
        %p462 = pneg %p237
        %p463 = pneg %p234
        %p464 = pneg %p265
        %p465 = pneg %p262
        %s466 = sand.u32 %s252, 1
        %s467 = scalar_lea.sflag [#allocation4], %s466
        %s468 = sand.u32 %s252, 1
        %s469 = smul.addr %s468, 8
        %s470 = scalar_lea.vmem [#allocation10], %s469
        %p471 = pneg %p293
        %p472 = pneg %p290
        %s473 = sand.u32 %s34, 1
        %s474 = scalar_lea.sflag [#allocation12], %s473
        %s475 = sand.u32 %s280, 1
        %s476 = smul.addr %s475, 8
        %s477 = scalar_lea.vmem [#allocation11], %s476
        %p478 = pneg %p321
        %p479 = pneg %p318
        %s480 = sand.u32 %s34, 1
        %s481 = scalar_lea.sflag [#allocation12], %s480
        %s482 = sand.u32 %s308, 1
        %s483 = smul.addr %s482, 8
        %s484 = scalar_lea.vmem [#allocation13], %s483
        %v485 = vld [vmem:[%s424] sm:$0xff]
        %v486 = vld [vmem:[%s1] sm:$0x1]
        %v487 = vld [vmem:[%s2] sm:$0x1]
        %vm488 = vcmask 261120
        %v489 = vsel %vm488, %v485, 0.0
        %490 = vadd.xlane.f32.xlu0 %v489
        %v491 = vpop.xlane.xlu0 %490
        %v492 = vrcp.pop 32.0
        %v493 = vmul.f32 %v491, %v492
        %v494 = vsub.f32 %v485, %v493
        %v495 = vmul.f32 %v494, %v494
        %v496 = vsel %vm488, %v495, 0.0
        %497 = vadd.xlane.f32.xlu0 %v496
        %v498 = vpop.xlane.xlu0 %497
        %v499 = vmul.f32 %v498, %v492
        %v500 = vadd.f32 %v499, 1e-06
        %v501 = vrsqrt.pop %v500
        %v502 = vmul.f32 %v494, %v501
        %v504 = vlaneseq
        %v505 = vshrl.u32 %v504, 7
        %v506 = vsub.s32 0, %v505
        %v507 = vrot.slane %v486, %v506
        %v509 = vmul.f32 %v502, %v507
        %v511 = vlaneseq
        %v512 = vshrl.u32 %v511, 7
        %v513 = vsub.s32 0, %v512
        %v514 = vrot.slane %v487, %v513
        %v516 = vadd.f32 %v509, %v514
        %v517 = vld [vmem:[#allocation5] sm:$0xff]
        %v518 = vld [vmem:[#allocation5 + $0x8] sm:$0xff]
        %v519 = vld [vmem:[#allocation5 + $0x10] sm:$0xff]
        %v520 = vld [vmem:[#allocation5 + $0x18] sm:$0xff]
        %v521 = vld [vmem:[%s4] sm:$0x1]
        %v523 = vlaneseq
        %v524 = vshrl.u32 %v523, 7
        %v525 = vsub.s32 0, %v524
        %v526 = vrot.slane %v521, %v525
        %v529 = vsel %vm488, %v516, 0
        %531 = vmatprep.subr.mxu0 0.0
        %532 = vmatpush1.msra.mxu0 %v517
        %533 = vmatprep.subr.mxu0 0.0
        %534 = vmatpush1.msra.mxu0 %v518
        %535 = vmatprep.subr.mxu0 0.0
        %536 = vmatpush1.msra.mxu0 %v519
        %537 = vmatprep.subr.mxu0 0.0
        %538 = vmatpush1.msra.mxu0 %v520
        %539 = vmatprep.subr.mxu0 0.0
        %540 = vmatpush1.msra.mxu0 0.0
        %541 = vmatprep.subr.mxu0 0.0
        %542 = vmatpush1.msra.mxu0 0.0
        %543 = vmatprep.subr.mxu0 0.0
        %544 = vmatpush1.msra.mxu0 0.0
        %545 = vmatprep.subr.mxu0 0.0
        %546 = vmatpush1.msra.mxu0 0.0
        %547 = vmatprep.subr.mxu0 0.0
        %548 = vmatpush1.msra.mxu0 0.0
        %549 = vmatprep.subr.mxu0 0.0
        %550 = vmatpush1.msra.mxu0 0.0
        %551 = vmatprep.subr.mxu0 0.0
        %552 = vmatpush1.msra.mxu0 0.0
        %553 = vmatprep.subr.mxu0 0.0
        %554 = vmatpush1.msra.mxu0 0.0
        %555 = vmatprep.subr.mxu0 0.0
        %556 = vmatpush1.msra.mxu0 0.0
        %557 = vmatprep.subr.mxu0 0.0
        %558 = vmatpush1.msra.mxu0 0.0
        %559 = vmatprep.subr.mxu0 0.0
        %560 = vmatpush1.msra.mxu0 0.0
        %561 = vmatprep.subr.mxu0 0.0
        %562 = vmatpush1.msra.mxu0 0.0
        %563 = vmatprep.subr.mxu0 0.0
        %564 = vmatpush1.msra.mxu0 0.0
        %565 = vmatprep.subr.mxu0 0.0
        %566 = vmatpush1.msra.mxu0 0.0
        %567 = vmatprep.subr.mxu0 0.0
        %568 = vmatpush1.msra.mxu0 0.0
        %569 = vmatprep.subr.mxu0 0.0
        %570 = vmatpush1.msra.mxu0 0.0
        %571 = vmatprep.subr.mxu0 0.0
        %572 = vmatpush1.msra.mxu0 0.0
        %573 = vmatprep.subr.mxu0 0.0
        %574 = vmatpush1.msra.mxu0 0.0
        %575 = vmatprep.subr.mxu0 0.0
        %576 = vmatpush1.msra.mxu0 0.0
        %577 = vmatprep.subr.mxu0 0.0
        %578 = vmatpush1.msra.mxu0 0.0
        %579 = vmatprep.subr.mxu0 0.0
        %580 = vmatpush1.msra.mxu0 0.0
        %581 = vmatprep.subr.mxu0 0.0
        %582 = vmatpush1.msra.mxu0 0.0
        %583 = vmatprep.subr.mxu0 0.0
        %584 = vmatpush1.msra.mxu0 0.0
        %585 = vmatprep.subr.mxu0 0.0
        %586 = vmatpush1.msra.mxu0 0.0
        %587 = vmatprep.subr.mxu0 0.0
        %588 = vmatpush1.msra.mxu0 0.0
        %589 = vmatprep.subr.mxu0 0.0
        %590 = vmatpush1.msra.mxu0 0.0
        %591 = vmatprep.subr.mxu0 0.0
        %592 = vmatpush1.msra.mxu0 0.0
        %593 = vmatprep.subr.mxu0 0.0
        %594 = vmatpush1.msra.mxu0 0.0
        %595 = vmatprep.mubr.f32.mxu0 0.0
        %596 = vmatmul.mubr.f32.gmra.mrb[0].mxu0 %v529
        %v597 = vpop.f32.mrb[0].mxu0
        %v598 = vadd.f32 %v526, %v597
        %v599 = vpop.f32.mrb[0].mxu0
        %600 = vdwg.mxu0
        %v601 = vld [vmem:[#allocation7] sm:$0xff]
        %v602 = vld [vmem:[#allocation7 + $0x8] sm:$0xff]
        %v603 = vld [vmem:[#allocation7 + $0x10] sm:$0xff]
        %v604 = vld [vmem:[#allocation7 + $0x18] sm:$0xff]
        %v605 = vld [vmem:[%s6] sm:$0x1]
        %v607 = vlaneseq
        %v608 = vshrl.u32 %v607, 7
        %v609 = vsub.s32 0, %v608
        %v610 = vrot.slane %v605, %v609
        %612 = vmatprep.subr.mxu0 0.0
        %613 = vmatpush1.msra.mxu0 %v601
        %614 = vmatprep.subr.mxu0 0.0
        %615 = vmatpush1.msra.mxu0 %v602
        %616 = vmatprep.subr.mxu0 0.0
        %617 = vmatpush1.msra.mxu0 %v603
        %618 = vmatprep.subr.mxu0 0.0
        %619 = vmatpush1.msra.mxu0 %v604
        %620 = vmatprep.subr.mxu0 0.0
        %621 = vmatpush1.msra.mxu0 0.0
        %622 = vmatprep.subr.mxu0 0.0
        %623 = vmatpush1.msra.mxu0 0.0
        %624 = vmatprep.subr.mxu0 0.0
        %625 = vmatpush1.msra.mxu0 0.0
        %626 = vmatprep.subr.mxu0 0.0
        %627 = vmatpush1.msra.mxu0 0.0
        %628 = vmatprep.subr.mxu0 0.0
        %629 = vmatpush1.msra.mxu0 0.0
        %630 = vmatprep.subr.mxu0 0.0
        %631 = vmatpush1.msra.mxu0 0.0
        %632 = vmatprep.subr.mxu0 0.0
        %633 = vmatpush1.msra.mxu0 0.0
        %634 = vmatprep.subr.mxu0 0.0
        %635 = vmatpush1.msra.mxu0 0.0
        %636 = vmatprep.subr.mxu0 0.0
        %637 = vmatpush1.msra.mxu0 0.0
        %638 = vmatprep.subr.mxu0 0.0
        %639 = vmatpush1.msra.mxu0 0.0
        %640 = vmatprep.subr.mxu0 0.0
        %641 = vmatpush1.msra.mxu0 0.0
        %642 = vmatprep.subr.mxu0 0.0
        %643 = vmatpush1.msra.mxu0 0.0
        %644 = vmatprep.subr.mxu0 0.0
        %645 = vmatpush1.msra.mxu0 0.0
        %646 = vmatprep.subr.mxu0 0.0
        %647 = vmatpush1.msra.mxu0 0.0
        %648 = vmatprep.subr.mxu0 0.0
        %649 = vmatpush1.msra.mxu0 0.0
        %650 = vmatprep.subr.mxu0 0.0
        %651 = vmatpush1.msra.mxu0 0.0
        %652 = vmatprep.subr.mxu0 0.0
        %653 = vmatpush1.msra.mxu0 0.0
        %654 = vmatprep.subr.mxu0 0.0
        %655 = vmatpush1.msra.mxu0 0.0
        %656 = vmatprep.subr.mxu0 0.0
        %657 = vmatpush1.msra.mxu0 0.0
        %658 = vmatprep.subr.mxu0 0.0
        %659 = vmatpush1.msra.mxu0 0.0
        %660 = vmatprep.subr.mxu0 0.0
        %661 = vmatpush1.msra.mxu0 0.0
        %662 = vmatprep.subr.mxu0 0.0
        %663 = vmatpush1.msra.mxu0 0.0
        %664 = vmatprep.subr.mxu0 0.0
        %665 = vmatpush1.msra.mxu0 0.0
        %666 = vmatprep.subr.mxu0 0.0
        %667 = vmatpush1.msra.mxu0 0.0
        %668 = vmatprep.subr.mxu0 0.0
        %669 = vmatpush1.msra.mxu0 0.0
        %670 = vmatprep.subr.mxu0 0.0
        %671 = vmatpush1.msra.mxu0 0.0
        %672 = vmatprep.subr.mxu0 0.0
        %673 = vmatpush1.msra.mxu0 0.0
        %674 = vmatprep.subr.mxu0 0.0
        %675 = vmatpush1.msra.mxu0 0.0
        %676 = vmatprep.mubr.f32.mxu0 0.0
        %677 = vmatmul.mubr.f32.gmra.mrb[0].mxu0 %v529
        %v678 = vpop.f32.mrb[0].mxu0
        %v679 = vadd.f32 %v610, %v678
        %v680 = vpop.f32.mrb[0].mxu0
        %681 = vdwg.mxu0
        %v682 = vld [vmem:[#allocation8] sm:$0xff]
        %v683 = vld [vmem:[#allocation8 + $0x8] sm:$0xff]
        %v684 = vld [vmem:[#allocation8 + $0x10] sm:$0xff]
        %v685 = vld [vmem:[#allocation8 + $0x18] sm:$0xff]
        %v686 = vld [vmem:[%s8] sm:$0x1]
        %v688 = vlaneseq
        %v689 = vshrl.u32 %v688, 7
        %v690 = vsub.s32 0, %v689
        %v691 = vrot.slane %v686, %v690
        %693 = vmatprep.subr.mxu0 0.0
        %694 = vmatpush1.msra.mxu0 %v682
        %695 = vmatprep.subr.mxu0 0.0
        %696 = vmatpush1.msra.mxu0 %v683
        %697 = vmatprep.subr.mxu0 0.0
        %698 = vmatpush1.msra.mxu0 %v684
        %699 = vmatprep.subr.mxu0 0.0
        %700 = vmatpush1.msra.mxu0 %v685
        %701 = vmatprep.subr.mxu0 0.0
        %702 = vmatpush1.msra.mxu0 0.0
        %703 = vmatprep.subr.mxu0 0.0
        %704 = vmatpush1.msra.mxu0 0.0
        %705 = vmatprep.subr.mxu0 0.0
        %706 = vmatpush1.msra.mxu0 0.0
        %707 = vmatprep.subr.mxu0 0.0
        %708 = vmatpush1.msra.mxu0 0.0
        %709 = vmatprep.subr.mxu0 0.0
        %710 = vmatpush1.msra.mxu0 0.0
        %711 = vmatprep.subr.mxu0 0.0
        %712 = vmatpush1.msra.mxu0 0.0
        %713 = vmatprep.subr.mxu0 0.0
        %714 = vmatpush1.msra.mxu0 0.0
        %715 = vmatprep.subr.mxu0 0.0
        %716 = vmatpush1.msra.mxu0 0.0
        %717 = vmatprep.subr.mxu0 0.0
        %718 = vmatpush1.msra.mxu0 0.0
        %719 = vmatprep.subr.mxu0 0.0
        %720 = vmatpush1.msra.mxu0 0.0
        %721 = vmatprep.subr.mxu0 0.0
        %722 = vmatpush1.msra.mxu0 0.0
        %723 = vmatprep.subr.mxu0 0.0
        %724 = vmatpush1.msra.mxu0 0.0
        %725 = vmatprep.subr.mxu0 0.0
        %726 = vmatpush1.msra.mxu0 0.0
        %727 = vmatprep.subr.mxu0 0.0
        %728 = vmatpush1.msra.mxu0 0.0
        %729 = vmatprep.subr.mxu0 0.0
        %730 = vmatpush1.msra.mxu0 0.0
        %731 = vmatprep.subr.mxu0 0.0
        %732 = vmatpush1.msra.mxu0 0.0
        %733 = vmatprep.subr.mxu0 0.0
        %734 = vmatpush1.msra.mxu0 0.0
        %735 = vmatprep.subr.mxu0 0.0
        %736 = vmatpush1.msra.mxu0 0.0
        %737 = vmatprep.subr.mxu0 0.0
        %738 = vmatpush1.msra.mxu0 0.0
        %739 = vmatprep.subr.mxu0 0.0
        %740 = vmatpush1.msra.mxu0 0.0
        %741 = vmatprep.subr.mxu0 0.0
        %742 = vmatpush1.msra.mxu0 0.0
        %743 = vmatprep.subr.mxu0 0.0
        %744 = vmatpush1.msra.mxu0 0.0
        %745 = vmatprep.subr.mxu0 0.0
        %746 = vmatpush1.msra.mxu0 0.0
        %747 = vmatprep.subr.mxu0 0.0
        %748 = vmatpush1.msra.mxu0 0.0
        %749 = vmatprep.subr.mxu0 0.0
        %750 = vmatpush1.msra.mxu0 0.0
        %751 = vmatprep.subr.mxu0 0.0
        %752 = vmatpush1.msra.mxu0 0.0
        %753 = vmatprep.subr.mxu0 0.0
        %754 = vmatpush1.msra.mxu0 0.0
        %755 = vmatprep.subr.mxu0 0.0
        %756 = vmatpush1.msra.mxu0 0.0
        %757 = vmatprep.mubr.f32.mxu0 0.0
        %758 = vmatmul.mubr.f32.gmra.mrb[0].mxu0 %v529
        %v759 = vpop.f32.mrb[0].mxu0
        %v760 = vadd.f32 %v691, %v759
        %v761 = vpop.f32.mrb[0].mxu0
        %762 = vdwg.mxu0
        %v763 = vmul.f32 %v598, 0.35355338
        %764 = vst.msk [vmem:[%s470] sm:$0xff] %vm488, %v763
        %765 = vst.msk [vmem:[%s477] sm:$0xff] %vm488, %v679
        %766 = vst.msk [vmem:[%s484] sm:$0xff] %vm488, %v760
        %s767 = sand.u32 %s252, 1
        %s768 = scalar_lea.sflag [#allocation4], %s767
        %s769 = sand.u32 %s252, 1
        %s770 = smul.addr %s769, 8
        %s771 = scalar_lea.vmem [#allocation10], %s770
        %s772 = sand.u32 %s34, 1
        %s773 = scalar_lea.sflag [#allocation12], %s772
        %s774 = sand.u32 %s280, 1
        %s775 = smul.addr %s774, 8
        %s776 = scalar_lea.vmem [#allocation11], %s775
        %s777 = sand.u32 %s34, 1
        %s778 = scalar_lea.sflag [#allocation12], %s777
        %s779 = sand.u32 %s308, 1
        %s780 = smul.addr %s779, 8
        %s781 = scalar_lea.vmem [#allocation13], %s780
        // Predicated region
        $region73: #{tpu_custom_call.1} parent=55 // pred_check
          %p782 = pneg %p262
        $region74: #{tpu_custom_call.1} parent=55 // pred_check_branch
          %784 = sbr.rel (%p782) target = $region76
        $region75: #{tpu_custom_call.1} parent=55 // pred_region
          %s786 = ssub.s32 128, 128
          %787 = vsyncadd %s768, %s786
          %s788 = sadd.s32 %s38, %s39
          %s789 = smul.addr %s788, 128
          %s790 = scalar_lea.hbm %s9, %s789
          %s792 = sshll.u32 %s771, 4
          %s793 = int_to_ptr.vmem [resolvable:$true] %s792
          %795 = dma.vmem_to_hbm [thread:$0]  %s793, 128, %s790, %s768
        $region76: #{tpu_custom_call.1} parent=55 // pred_fallthru
          _
        // Predicated region
        $region77: #{tpu_custom_call.1} parent=55 // pred_check
          %p796 = pneg %p290
        $region78: #{tpu_custom_call.1} parent=55 // pred_check_branch
          %798 = sbr.rel (%p796) target = $region80
        $region79: #{tpu_custom_call.1} parent=55 // pred_region
          %s800 = ssub.s32 128, 128
          %801 = vsyncadd %s773, %s800
          %s802 = sadd.s32 %s38, %s39
          %s803 = smul.addr %s802, 128
          %s804 = scalar_lea.hbm %s10, %s803
          %s806 = sshll.u32 %s776, 4
          %s807 = int_to_ptr.vmem [resolvable:$true] %s806
          %809 = dma.vmem_to_hbm [thread:$0]  %s807, 128, %s804, %s773
        $region80: #{tpu_custom_call.1} parent=55 // pred_fallthru
          _
        // Predicated region
        $region81: #{tpu_custom_call.1} parent=55 // pred_check
          %p810 = pneg %p318
        $region82: #{tpu_custom_call.1} parent=55 // pred_check_branch
          %812 = sbr.rel (%p810) target = $region84
        $region83: #{tpu_custom_call.1} parent=55 // pred_region
          %s814 = ssub.s32 128, 128
          %815 = vsyncadd %s778, %s814
          %s816 = sadd.s32 %s38, %s39
          %s817 = smul.addr %s816, 128
          %s818 = scalar_lea.hbm %s11, %s817
          %s820 = sshll.u32 %s781, 4
          %s821 = int_to_ptr.vmem [resolvable:$true] %s820
          %823 = dma.vmem_to_hbm [thread:$0]  %s821, 128, %s818, %s778
        $region84: #{tpu_custom_call.1} parent=55 // pred_fallthru
          _
      $region56: #{tpu_custom_call.1} parent=5 // pred_fallthru
        _
      %p824 = scmp.le.s32.totalorder 2, %s29
      // Predicated region
      $region85: #{tpu_custom_call.1} parent=5 // pred_check
        %p825 = pneg %p824
      $region86: #{tpu_custom_call.1} parent=5 // pred_check_branch
        %827 = sbr.rel (%p825) target = $region88
      $region87: #{tpu_custom_call.1} parent=5 // pred_region
        %s828 = ssub.s32 %s29, 2
        // Predicated region
        $region89: #{tpu_custom_call.1} parent=87 // pred_check
          %p829 = pneg %p268
        $region90: #{tpu_custom_call.1} parent=87 // pred_check_branch
          %831 = sbr.rel (%p829) target = $region92
        $region91: #{tpu_custom_call.1} parent=87 // pred_region
          %s832 = sand.u32 %s253, 1
          %s833 = scalar_lea.sflag [#allocation4], %s832
          %s834 = sand.u32 %s253, 1
          %s835 = smul.addr %s834, 8
          %s836 = scalar_lea.vmem [#allocation10], %s835
          %837 = dma.done %s833, 128
        $region92: #{tpu_custom_call.1} parent=87 // pred_fallthru
          _
        // Predicated region
        $region93: #{tpu_custom_call.1} parent=87 // pred_check
          %p838 = pneg %p296
        $region94: #{tpu_custom_call.1} parent=87 // pred_check_branch
          %840 = sbr.rel (%p838) target = $region96
        $region95: #{tpu_custom_call.1} parent=87 // pred_region
          %s841 = sand.u32 %s35, 1
          %s842 = scalar_lea.sflag [#allocation12], %s841
          %s843 = sand.u32 %s281, 1
          %s844 = smul.addr %s843, 8
          %s845 = scalar_lea.vmem [#allocation11], %s844
          %846 = dma.done %s842, 128
        $region96: #{tpu_custom_call.1} parent=87 // pred_fallthru
          _
        // Predicated region
        $region97: #{tpu_custom_call.1} parent=87 // pred_check
          %p847 = pneg %p324
        $region98: #{tpu_custom_call.1} parent=87 // pred_check_branch
          %849 = sbr.rel (%p847) target = $region100
        $region99: #{tpu_custom_call.1} parent=87 // pred_region
          %s850 = sand.u32 %s35, 1
          %s851 = scalar_lea.sflag [#allocation12], %s850
          %s852 = sand.u32 %s309, 1
          %s853 = smul.addr %s852, 8
          %s854 = scalar_lea.vmem [#allocation13], %s853
          %855 = dma.done %s851, 128
        $region100: #{tpu_custom_call.1} parent=87 // pred_fallthru
          _
      $region88: #{tpu_custom_call.1} parent=5 // pred_fallthru
        _
    $region6: #{tpu_custom_call.1} parent=1 // loop_footer
      %s33 = sadd.s32 1, %s29
    $region7: #{tpu_custom_call.1} parent=1 // loop_footer_branch
      %28 = sbr.rel target = $region3
    $region8: #{tpu_custom_call.1} parent=1 // loop_exit
      _
    %856 = vsyncpa [#allocation3], 1
    %s857 = scalar_lea.sflag [#allocation3], 1
    %858 = vsyncpa %s857, 1
    %859 = vsyncpa [#allocation6], 1
    %860 = vsyncpa [#allocation9], 1
    %861 = vsyncpa [#allocation4], 1
    %s862 = scalar_lea.sflag [#allocation4], 1
    %863 = vsyncpa %s862, 1
    %864 = vsyncpa [#allocation12], 1
    %s865 = scalar_lea.sflag [#allocation12], 1
    %866 = vsyncpa %s865, 1

</llo_original>
